<compile_context>
chip_gen: v5e
topology: v5e:2x2
jax: 0.10.0
libtpu: 0.0.40
codegen_flags: <defaults>
</compile_context>

<pallas_src>
import functools

import jax
import jax.numpy as jnp
import numpy as np
from jax.experimental import pallas as pl
from jax.experimental.pallas import tpu as pltpu

LANE = 128
VMEM_LIMIT = 32 * 1024 * 1024   # explicit scoped-VMEM budget (safe on v5e..v7x)


def _round_up(x, m):
    return (x + m - 1) // m * m


def _cdiv(a, b):
    return -(-a // b)


# --------------------------------------------------------------------------
# Pallas matmul kernel: bf16 MXU inputs, f32 accumulate, fused bias + act,
# lane-dense (N padded to a multiple of 128) stores, bf16 or f32 output.
# --------------------------------------------------------------------------
def _mm_bias_act_kernel(a_ref, w_ref, b_ref, o_ref, *, act):
    acc = jnp.dot(a_ref[...], w_ref[...], preferred_element_type=jnp.float32)
    acc = acc + b_ref[...]
    if act == "relu":
        acc = jnp.maximum(acc, 0.0)
    elif act == "sigmoid":
        acc = jax.nn.sigmoid(acc)
    o_ref[...] = acc.astype(o_ref.dtype)


def _choose_tm(M):
    # Single full block for small M; otherwise >= 2 blocks so the parallel M
    # axis can be split across TensorCores (v7x megacore).  tm is a multiple
    # of 8 so partial last blocks are legal.
    if M <= 256:
        return M
    nblk = max(2, _cdiv(M, 512))
    return _round_up(_cdiv(M, nblk), 8)


def pallas_matmul(a, w, bias, act="none", out_dtype=jnp.bfloat16):
    """a: [M, K] (cast to bf16), w: [K, Npad] bf16, bias: [1, Npad] f32
    -> [M, Npad] out_dtype with bias/activation fused.  Partial M blocks are
    handled by Pallas (masked stores), no XLA pad/slice copies."""
    M, K = a.shape
    Npad = w.shape[1]
    if a.dtype != jnp.bfloat16:
        a = a.astype(jnp.bfloat16)
    tm = _choose_tm(M)
    grid = (_cdiv(M, tm),)
    out_isz = np.dtype(out_dtype).itemsize
    cost = pl.CostEstimate(
        flops=2 * M * K * Npad,
        transcendentals=M * Npad if act == "sigmoid" else 0,
        bytes_accessed=M * K * 2 + K * Npad * 2 + Npad * 4 + M * Npad * out_isz)
    return pl.pallas_call(
        functools.partial(_mm_bias_act_kernel, act=act),
        out_shape=jax.ShapeDtypeStruct((M, Npad), out_dtype),
        grid_spec=pltpu.PrefetchScalarGridSpec(
            num_scalar_prefetch=0,
            grid=grid,
            in_specs=[
                pl.BlockSpec((tm, K), lambda i: (i, 0)),
                pl.BlockSpec((K, Npad), lambda i: (0, 0)),   # weight VMEM-resident
                pl.BlockSpec((1, Npad), lambda i: (0, 0)),
            ],
            out_specs=pl.BlockSpec((tm, Npad), lambda i: (i, 0)),
        ),
        compiler_params=pltpu.CompilerParams(
            dimension_semantics=("parallel",),
            vmem_limit_bytes=VMEM_LIMIT),
        cost_estimate=cost,
    )(a, w, bias)


# --------------------------------------------------------------------------
# Fused FC-ladder kernel: one pallas_call for the whole middle section.
# All weights live in VMEM; all matmuls run M=8 (padded batch) on the MXU.
# --------------------------------------------------------------------------
def _fused_fc_kernel(h_ref, eps1_ref, eps2_ref,
                     w_e5, b_e5, w_ef, b_ef, w_d21, b_d21, w_d22, b_d22,
                     w_z11, b_z11, w_z12, b_z12, w_x0, b_x0, w_ct1, b_ct1,
                     d_ref, z1_ref, z2_ref, mu_q1_ref, lv_q1_ref,
                     mu_p1_ref, lv_p1_ref, mu_q1h_ref, lv_q1h_ref,
                     mu_q2_ref, lv_q2_ref, *, z1_dim, z2_dim):
    def mm(x, w_r, b_r, act=None, n=None):
        y = jnp.dot(x.astype(jnp.bfloat16), w_r[...],
                    preferred_element_type=jnp.float32) + b_r[...]
        if act == "relu":
            y = jnp.maximum(y, 0.0)
        if n is not None:
            y = y[:, :n]
        return y

    # encoder tail (SimpleConv64): 4x4-window conv == FC, then latent head
    h5 = mm(h_ref[...], w_e5, b_e5, act="relu", n=256)
    d1 = mm(h5, w_ef, b_ef, n=2 * z1_dim)
    mu_q1h, lv_q1h = d1[:, :z1_dim], d1[:, z1_dim:]

    # nn_d_2 (SimpleFCNNEncoder)
    # TODO(synk): hidden activation of SimpleFCNN{Encoder,Decoder} assumed ReLU.
    g2 = mm(d1, w_d21, b_d21, act="relu", n=2 * z2_dim)
    d2 = mm(g2, w_d22, b_d22, n=2 * z2_dim)
    mu_q2, lv_q2 = d2[:, :z2_dim], d2[:, z2_dim:]
    z2 = mu_q2 + jnp.exp(0.5 * lv_q2) * eps2_ref[...]

    # nn_z_1 (SimpleFCNNDecoder) + precision-weighted merge (stable form)
    g1 = mm(z2, w_z11, b_z11, act="relu", n=2 * z1_dim)
    h1 = mm(g1, w_z12, b_z12, n=2 * z1_dim)
    mu_p1, lv_p1 = h1[:, :z1_dim], h1[:, z1_dim:]
    w_hat = jax.nn.sigmoid(lv_p1 - lv_q1h)      # prec_q_hat / (prec_q_hat + prec_p)
    mu_q1 = w_hat * mu_q1h + (1.0 - w_hat) * mu_p1
    mneg = jnp.maximum(-lv_q1h, -lv_p1)
    lv_q1 = -(mneg + jnp.log(jnp.exp(-lv_q1h - mneg) + jnp.exp(-lv_p1 - mneg)))
    z1 = mu_q1 + jnp.exp(0.5 * lv_q1) * eps1_ref[...]

    # decoder head (SimpleConv64 decoder): 1x1 conv + 1x1 -> 4x4 ConvTranspose
    d0 = mm(z1, w_x0, b_x0, act="relu", n=256)
    dct1 = mm(d0, w_ct1, b_ct1, act="relu")                 # (B, 16*64), N exact

    d_ref[...] = dct1.astype(d_ref.dtype)
    z1_ref[...] = z1
    z2_ref[...] = z2
    mu_q1_ref[...] = mu_q1
    lv_q1_ref[...] = lv_q1
    mu_p1_ref[...] = mu_p1
    lv_p1_ref[...] = lv_p1
    mu_q1h_ref[...] = mu_q1h
    lv_q1h_ref[...] = lv_q1h
    mu_q2_ref[...] = mu_q2
    lv_q2_ref[...] = lv_q2


def fused_fc_ladder(params, h4_flat, eps1, eps2):
    B = h4_flat.shape[0]
    z1d, z2d = params["z1_dim"], params["z2_dim"]
    ct1_n = params["x_ct1"]["n"]
    Bp = _round_up(B, 8)

    def pad_b(x):
        return jnp.pad(x, ((0, Bp - B), (0, 0))) if Bp != B else x

    wb = []
    for name in ("e_conv5", "e_fc", "d2_fc1", "d2_fc2",
                 "z1_fc1", "z1_fc2", "x_conv0", "x_ct1"):
        wb += [params[name]["w"], params[name]["b"]]

    f32 = jnp.float32
    out_shapes = (
        jax.ShapeDtypeStruct((Bp, ct1_n), jnp.bfloat16),   # decoder phase slab
        jax.ShapeDtypeStruct((Bp, z1d), f32),              # z1
        jax.ShapeDtypeStruct((Bp, z2d), f32),              # z2
        jax.ShapeDtypeStruct((Bp, z1d), f32),              # mu_q_1
        jax.ShapeDtypeStruct((Bp, z1d), f32),              # log_var_q_1
        jax.ShapeDtypeStruct((Bp, z1d), f32),              # mu_p_1
        jax.ShapeDtypeStruct((Bp, z1d), f32),              # log_var_p_1
        jax.ShapeDtypeStruct((Bp, z1d), f32),              # mu_q_1_hat
        jax.ShapeDtypeStruct((Bp, z1d), f32),              # log_var_q_1_hat
        jax.ShapeDtypeStruct((Bp, z2d), f32),              # mu_q_2
        jax.ShapeDtypeStruct((Bp, z2d), f32),              # log_var_q_2
    )
    outs = pl.pallas_call(
        functools.partial(_fused_fc_kernel, z1_dim=z1d, z2_dim=z2d),
        out_shape=out_shapes,
        compiler_params=pltpu.CompilerParams(vmem_limit_bytes=VMEM_LIMIT),
    )(pad_b(h4_flat.astype(jnp.bfloat16)), pad_b(eps1), pad_b(eps2), *wb)
    return tuple(o[:B] for o in outs)


# --------------------------------------------------------------------------
# Conv layer wrappers (glue in JAX, all FLOPs in the Pallas matmul above)
# --------------------------------------------------------------------------
def _space_to_depth(x, f=2):
    B, H, W, C = x.shape
    x = x.reshape(B, H // f, f, W // f, f, C)
    x = jnp.transpose(x, (0, 1, 3, 2, 4, 5))
    return x.reshape(B, H // f, W // f, f * f * C)


def _patches_2x2(x):
    """2x2 stride-1 'valid' patch extraction (4 taps, no stride, 1 concat)."""
    B, S, T, C = x.shape
    Ho, Wo = S - 1, T - 1
    taps = [x[:, ty:ty + Ho, tx:tx + Wo, :] for ty in (0, 1) for tx in (0, 1)]
    col = jnp.concatenate(taps, axis=-1)
    return col.reshape(B * Ho * Wo, 4 * C), Ho, Wo


def conv2d_k4s2p1(x, p, act="relu", out_dtype=jnp.bfloat16):
    """Conv2d(k=4, s=2, p=1) via space-to-depth phase decomposition."""
    B, H, W, C = x.shape
    xp = jnp.pad(x, ((0, 0), (1, 1), (1, 1), (0, 0)))
    xs = _space_to_depth(xp)                               # (B, H/2+1, W/2+1, 4C)
    col, Ho, Wo = _patches_2x2(xs)
    y = pallas_matmul(col, p["w"], p["b"], act=act, out_dtype=out_dtype)
    return y[:, :p["n"]].reshape(B, Ho, Wo, p["n"])


def conv2d_k2s2(x, p, act="relu", out_dtype=jnp.bfloat16):
    """Conv2d(k=2, s=2, p=0) == space-to-depth + Pallas linear (no im2col)."""
    B, H, W, C = x.shape
    xs = _space_to_depth(x)
    y = pallas_matmul(xs.reshape(B * (H // 2) * (W // 2), 4 * C),
                      p["w"], p["b"], act=act, out_dtype=out_dtype)
    return y[:, :p["n"]].reshape(B, H // 2, W // 2, p["n"])


def conv_transpose2d_s2(x, p, act="relu", out_dtype=jnp.bfloat16):
    """ConvTranspose2d(k=4, stride=2, pad=1) via sub-pixel decomposition:
    one stride-1 2x2 conv with 4*Cout phase channels + interleave."""
    # TODO(synk): the phase->pixel interleave could be folded into the next
    # layer's patch extraction (perf only); kept explicit for clarity.
    B, H, W, _ = x.shape
    Cout = p["n"] // 4
    xp = jnp.pad(x, ((0, 0), (1, 1), (1, 1), (0, 0)))
    col, _, _ = _patches_2x2(xp)                           # (B*(H+1)*(W+1), 4*Cin)
    y = pallas_matmul(col, p["w"], p["b"], act=act, out_dtype=out_dtype)
    y = y[:, :p["n"]].reshape(B, H + 1, W + 1, 2, 2, Cout)
    # output pixel (2i+dy, 2j+dx) <- phase (1-dy, 1-dx) at conv pos (i+dy, j+dx)
    slabs = [y[:, dy:dy + H, dx:dx + W, 1 - dy, 1 - dx, :]
             for dy in (0, 1) for dx in (0, 1)]
    s = jnp.stack(slabs, axis=0).reshape(2, 2, B, H, W, Cout)
    return jnp.transpose(s, (2, 3, 0, 4, 1, 5)).reshape(B, 2 * H, 2 * W, Cout)


# --------------------------------------------------------------------------
# Parameter init (PyTorch-default-style uniform) + one-time packing into the
# kernel layout: wmat [K, Npad>=128] bf16, bias [1, Npad] f32.
# --------------------------------------------------------------------------
def _init_linear(key, in_dim, out_dim):
    k1, k2 = jax.random.split(key)
    bound = 1.0 / np.sqrt(in_dim)
    w = jax.random.uniform(k1, (out_dim, in_dim), jnp.float32, -bound, bound)
    b = jax.random.uniform(k2, (out_dim,), jnp.float32, -bound, bound)
    return w, b


def _init_conv(key, cout, cin, k):
    k1, k2 = jax.random.split(key)
    bound = 1.0 / np.sqrt(cin * k * k)
    w = jax.random.uniform(k1, (cout, cin, k, k), jnp.float32, -bound, bound)
    b = jax.random.uniform(k2, (cout,), jnp.float32, -bound, bound)
    return w, b


def _init_convT(key, cin, cout, k):
    k1, k2 = jax.random.split(key)
    bound = 1.0 / np.sqrt(cout * k * k)
    w = jax.random.uniform(k1, (cin, cout, k, k), jnp.float32, -bound, bound)
    b = jax.random.uniform(k2, (cout,), jnp.float32, -bound, bound)
    return w, b


def _pack(wmat, bias):
    K, N = wmat.shape
    Npad = _round_up(N, LANE)
    if Npad != N:
        wmat = jnp.pad(wmat, ((0, 0), (0, Npad - N)))
        bias = jnp.pad(bias, (0, Npad - N))
    return {"w": wmat.astype(jnp.bfloat16),
            "b": bias.reshape(1, Npad).astype(jnp.float32),
            "n": N}


def _prep_linear(w, b):
    return _pack(w.T, b)


def _prep_conv(w, b):
    # Conv2d weight [Cout, Cin, kh, kw] -> [(kh, kw, Cin), Cout]  (NHWC patches)
    Cout, Cin, kh, kw = w.shape
    wmat = jnp.transpose(w, (2, 3, 1, 0)).reshape(kh * kw * Cin, Cout)
    return _pack(wmat, b)


def _prep_conv_k4s2p1(w, b):
    # Conv2d(k=4, s=2, p=1) weight -> phase-decomposed 2x2 stride-1 conv over
    # the space-to-depth'd padded input.  K ordering (ty, tx, ry, rx, ci),
    # matching _patches_2x2(_space_to_depth(pad(x))); value w[co, ci, 2ty+ry, 2tx+rx].
    Cout, Cin, kh, kw = w.shape
    assert kh == 4 and kw == 4
    w6 = w.reshape(Cout, Cin, 2, 2, 2, 2)                  # (co, ci, ty, ry, tx, rx)
    g = jnp.transpose(w6, (2, 4, 3, 5, 1, 0))              # (ty, tx, ry, rx, ci, co)
    return _pack(g.reshape(16 * Cin, Cout), b)


def _prep_convT_1x1(w, b):
    # ConvTranspose2d [Cin, Cout, kh, kw] on a 1x1 input:
    # y[b, ky, kx, co] = sum_ci x[b, ci] * w[ci, co, ky, kx] + b[co]
    Cin, Cout, kh, kw = w.shape
    wmat = jnp.transpose(w, (0, 2, 3, 1)).reshape(Cin, kh * kw * Cout)
    return _pack(wmat, jnp.tile(b, kh * kw))


def _prep_convT_s2(w, b):
    # ConvTranspose2d [Cin, Cout, 4, 4], stride 2, pad 1 -> phase-decomposed
    # 2x2 stride-1 conv.  Tap weight g[a, b, ci, py, px, co] =
    # w[ci, co, py + (1-a)*2, px + (1-b)*2]; K index (a, b, ci), N (py, px, co).
    Cin, Cout, kh, kw = w.shape
    assert kh == 4 and kw == 4
    w_r = jnp.transpose(w, (2, 3, 0, 1))                   # (ky, kx, ci, co)
    w6 = w_r.reshape(2, 2, 2, 2, Cin, Cout)                # (ty, py, tx, px, ci, co)
    g = jnp.transpose(w6, (0, 2, 4, 1, 3, 5))              # (ty, tx, ci, py, px, co)
    g = jnp.flip(g, axis=(0, 1))                           # a = 1 - ty, b = 1 - tx
    return _pack(g.reshape(4 * Cin, 4 * Cout), jnp.tile(b, 4))


def init_ladder_vae_params(key, z1_dim, z2_dim, num_channels):
    keys = iter(jax.random.split(key, 20))
    p = {"z1_dim": z1_dim, "z2_dim": z2_dim}
    # nn_d_1: SimpleConv64 encoder (latent_dim = 2*z1)
    p["e_conv1"] = _prep_conv_k4s2p1(*_init_conv(next(keys), 32, num_channels, 4))
    p["e_conv2"] = _prep_conv_k4s2p1(*_init_conv(next(keys), 32, 32, 4))
    p["e_conv3"] = _prep_conv(*_init_conv(next(keys), 64, 32, 2))
    p["e_conv4"] = _prep_conv(*_init_conv(next(keys), 64, 64, 2))
    p["e_conv5"] = _prep_conv(*_init_conv(next(keys), 256, 64, 4))   # 4x4 window == FC
    p["e_fc"] = _prep_linear(*_init_linear(next(keys), 256, 2 * z1_dim))
    # nn_d_2: SimpleFCNNEncoder(out=2*z2, in=2*z1, h=[2*z2])
    p["d2_fc1"] = _prep_linear(*_init_linear(next(keys), 2 * z1_dim, 2 * z2_dim))
    p["d2_fc2"] = _prep_linear(*_init_linear(next(keys), 2 * z2_dim, 2 * z2_dim))
    # nn_z_1: SimpleFCNNDecoder(latent=2*z1, in=z2, h=[2*z1])
    # TODO(synk): L0_FCNNDecoder (l_zero_reg=True) path not implemented.
    p["z1_fc1"] = _prep_linear(*_init_linear(next(keys), z2_dim, 2 * z1_dim))
    p["z1_fc2"] = _prep_linear(*_init_linear(next(keys), 2 * z1_dim, 2 * z1_dim))
    # nn_x: SimpleConv64 decoder (latent = z1)
    p["x_conv0"] = _prep_conv(*_init_conv(next(keys), 256, z1_dim, 1))      # 1x1 conv
    p["x_ct1"] = _prep_convT_1x1(*_init_convT(next(keys), 256, 64, 4))      # 1x1 -> 4x4
    p["x_ct2"] = _prep_convT_s2(*_init_convT(next(keys), 64, 64, 4))
    p["x_ct3"] = _prep_convT_s2(*_init_convT(next(keys), 64, 32, 4))
    p["x_ct4"] = _prep_convT_s2(*_init_convT(next(keys), 32, 32, 4))
    p["x_ct5"] = _prep_convT_s2(*_init_convT(next(keys), 32, num_channels, 4))
    return p


# --------------------------------------------------------------------------
# LadderVAE forward
# --------------------------------------------------------------------------
def ladder_vae_forward(params, x_true, rng):
    B = x_true.shape[0]
    z1d, z2d = params["z1_dim"], params["z2_dim"]
    x = jnp.transpose(x_true, (0, 2, 3, 1)).astype(jnp.bfloat16)     # NCHW -> NHWC once

    # ----- encode_to_z2 : nn_d_1 (SimpleConv64 encoder) conv trunk -----
    h = conv2d_k4s2p1(x, params["e_conv1"], act="relu")               # 64 -> 32
    h = conv2d_k4s2p1(h, params["e_conv2"], act="relu")               # 32 -> 16
    h = conv2d_k2s2(h, params["e_conv3"], act="relu")                 # 16 -> 8
    h = conv2d_k2s2(h, params["e_conv4"], act="relu")                 # 8 -> 4

    k1, k2 = jax.random.split(rng)
    eps2 = jax.random.normal(k1, (B, z2d), jnp.float32)
    eps1 = jax.random.normal(k2, (B, z1d), jnp.float32)

    # ----- fused FC ladder: encoder tail, nn_d_2, reparam z2, nn_z_1,
    #       precision-weighted merge, reparam z1, decoder 1x1 + 1x1->4x4 -----
    (d, z_1, z_2, mu_q_1, log_var_q_1, mu_p_1, log_var_p_1,
     mu_q_1_hat, log_var_q_1_hat, mu_q_2, log_var_q_2) = fused_fc_ladder(
        params, h.reshape(B, -1), eps1, eps2)

    # ----- decode(z1) : nn_x (SimpleConv64 decoder) upsampling + sigmoid -----
    ct1_cout = params["x_ct1"]["n"] // 16
    d = d.reshape(B, 4, 4, ct1_cout)
    d = conv_transpose2d_s2(d, params["x_ct2"], act="relu")           # 4 -> 8
    d = conv_transpose2d_s2(d, params["x_ct3"], act="relu")           # 8 -> 16
    d = conv_transpose2d_s2(d, params["x_ct4"], act="relu")           # 16 -> 32
    d = conv_transpose2d_s2(d, params["x_ct5"], act="sigmoid",
                            out_dtype=jnp.float32)                    # 32 -> 64
    x_recon = jnp.transpose(d, (0, 3, 1, 2))                          # back to NCHW

    return {
        "x_recon": x_recon, "z1": z_1, "z2": z_2,
        "mu_q_1": mu_q_1, "log_var_q_1": log_var_q_1,
        "mu_p_1": mu_p_1, "log_var_p_1": log_var_p_1,
        "mu_q_1_hat": mu_q_1_hat, "log_var_q_1_hat": log_var_q_1_hat,
        "mu_q_2": mu_q_2, "log_var_q_2": log_var_q_2,
        "mu_q_2_hat": mu_q_2, "log_var_q_2_hat": log_var_q_2,
    }


# --------------------------------------------------------------------------
# lax-based references for the numerically riskiest pieces (self-checks)
# --------------------------------------------------------------------------
def _conv_k4s2p1_ref(x, w, b):
    rhs = jnp.transpose(w, (2, 3, 1, 0))                   # HWIO
    y = jax.lax.conv_general_dilated(
        x, rhs, window_strides=(2, 2), padding=((1, 1), (1, 1)),
        dimension_numbers=("NHWC", "HWIO", "NHWC"))
    return y + b


def _conv_k2s2_ref(x, w, b):
    rhs = jnp.transpose(w, (2, 3, 1, 0))
    y = jax.lax.conv_general_dilated(
        x, rhs, window_strides=(2, 2), padding=((0, 0), (0, 0)),
        dimension_numbers=("NHWC", "HWIO", "NHWC"))
    return y + b


def _convT_s2_ref(x, w, b):
    # PyTorch ConvTranspose2d(k=4, s=2, p=1) == correlation of the 2x-dilated
    # input with the spatially flipped kernel, padding k-1-p = 2.
    rhs = jnp.transpose(w[:, :, ::-1, ::-1], (2, 3, 0, 1))  # (kh, kw, Cin, Cout)
    y = jax.lax.conv_general_dilated(
        x, rhs, window_strides=(1, 1), padding=((2, 2), (2, 2)),
        lhs_dilation=(2, 2), dimension_numbers=("NHWC", "HWIO", "NHWC"))
    return y + b


def _check_close(name, got, ref):
    err = float(jnp.max(jnp.abs(got - ref)))
    scale = float(jnp.max(jnp.abs(ref)))
    assert err <= 1e-2 + 2e-2 * scale, f"{name} mismatch: err={err} scale={scale}"


# --------------------------------------------------------------------------
if __name__ == "__main__":
    # Small config consistent with the module: z_dim = [z2_dim, z1_dim]
    z2_dim, z1_dim = 8, 16
    num_channels = 3
    image_size = 64          # SimpleConv64 requires 64x64 images
    batch = 2

    key = jax.random.PRNGKey(0)
    k_params, k_data, k_noise, k_check = jax.random.split(key, 4)

    # --- numerical self-checks of the stride-2 conv / conv-transpose paths ---
    kc = jax.random.split(k_check, 4)
    xw = jax.random.normal(kc[0], (2, 8, 8, 16), jnp.float32) * 0.5
    w_t, b_t = _init_convT(kc[1], 16, 24, 4)
    _check_close("conv_transpose_s2",
                 conv_transpose2d_s2(xw, _prep_convT_s2(w_t, b_t),
                                     act="none", out_dtype=jnp.float32),
                 _convT_s2_ref(xw, w_t, b_t))
    w_c, b_c = _init_conv(kc[2], 24, 16, 4)
    _check_close("conv_k4s2p1",
                 conv2d_k4s2p1(xw, _prep_conv_k4s2p1(w_c, b_c),
                               act="none", out_dtype=jnp.float32),
                 _conv_k4s2p1_ref(xw, w_c, b_c))
    w_d, b_d = _init_conv(kc[3], 24, 16, 2)
    _check_close("conv_k2s2",
                 conv2d_k2s2(xw, _prep_conv(w_d, b_d),
                             act="none", out_dtype=jnp.float32),
                 _conv_k2s2_ref(xw, w_d, b_d))

    # --- full forward pass ---
    params = init_ladder_vae_params(k_params, z1_dim, z2_dim, num_channels)
    x_true = jax.random.uniform(
        k_data, (batch, num_channels, image_size, image_size), jnp.float32)

    # params are closed over (static) so packed layout widths stay Python ints
    fwd = jax.jit(functools.partial(ladder_vae_forward, params))
    out = fwd(x_true, k_noise)
    jax.block_until_ready(out["x_recon"])

    assert out["x_recon"].shape == (batch, num_channels, image_size, image_size)
    assert out["z1"].shape == (batch, z1_dim)
    assert out["z2"].shape == (batch, z2_dim)
    assert bool(jnp.all(jnp.isfinite(out["x_recon"])))
    assert bool(jnp.all((out["x_recon"] >= 0.0) & (out["x_recon"] <= 1.0)))
    assert bool(jnp.all(jnp.isfinite(out["mu_q_1"])))
    assert bool(jnp.all(jnp.isfinite(out["log_var_q_1"])))
    print("KERNEL_OK")
</pallas_src>

<mosaic_0001>
module attributes {stable_mosaic.version = 11 : i64} {
  func.func @_mm_bias_act_kernel(%arg0: i32, %arg1: memref<162x64xbf16, #tpu.memory_space<vmem>>, %arg2: memref<64x128xbf16, #tpu.memory_space<vmem>>, %arg3: memref<1x128xf32, #tpu.memory_space<vmem>>, %arg4: memref<162x128xf32, #tpu.memory_space<vmem>>) attributes {dimension_semantics = [#tpu.dimension_semantics<parallel>], iteration_bounds = array<i64: 1>, scalar_prefetch = 0 : i64, scratch_operands = 0 : i64, tpu.core_type = #tpu.core_type<tc>, window_params = [{transform_indices = @transform_0, window_bounds = array<i64: 162, 64>}, {pipeline_mode = #tpu.pipeline_mode<synchronous>, transform_indices = @transform_1, window_bounds = array<i64: 64, 128>}, {pipeline_mode = #tpu.pipeline_mode<synchronous>, transform_indices = @transform_2, window_bounds = array<i64: 1, 128>}, {transform_indices = @transform_3, window_bounds = array<i64: 162, 128>}]} {
    %c0 = arith.constant 0 : index
    %c0_0 = arith.constant 0 : index
    %0 = vector.load %arg1[%c0, %c0_0] : memref<162x64xbf16, #tpu.memory_space<vmem>>, vector<162x64xbf16>
    %c0_1 = arith.constant 0 : index
    %c0_2 = arith.constant 0 : index
    %1 = vector.load %arg2[%c0_1, %c0_2] : memref<64x128xbf16, #tpu.memory_space<vmem>>, vector<64x128xbf16>
    %cst = arith.constant dense<0.000000e+00> : vector<162x128xf32>
    %2 = tpu.matmul %0, %1, %cst {dimension_numbers = #tpu.dot_dimension_numbers<[1], [0], [0], [1], [0, 0, 1, 1], [], []>} : vector<162x64xbf16>, vector<64x128xbf16>, vector<162x128xf32> -> vector<162x128xf32>
    %c0_3 = arith.constant 0 : index
    %c0_4 = arith.constant 0 : index
    %3 = vector.load %arg3[%c0_3, %c0_4] : memref<1x128xf32, #tpu.memory_space<vmem>>, vector<1x128xf32>
    %4 = vector.broadcast %3 : vector<1x128xf32> to vector<162x128xf32>
    %5 = arith.addf %2, %4 : vector<162x128xf32>
    %c0_5 = arith.constant 0 : index
    %c0_6 = arith.constant 0 : index
    %6 = vector.load %arg4[%c0_5, %c0_6] : memref<162x128xf32, #tpu.memory_space<vmem>>, vector<162x128xf32>
    tpu.vector_store %arg4[%c0_5, %c0_6], %5 {strides = array<i32>} : memref<162x128xf32, #tpu.memory_space<vmem>>, vector<162x128xf32>,
    return
  }
  func.func @transform_0(%arg0: i32) -> (i32, i32) {
    %c0_i32 = arith.constant 0 : i32
    %c0_i32_0 = arith.constant 0 : i32
    return %arg0, %c0_i32 : i32, i32
  }
  func.func @transform_1(%arg0: i32) -> (i32, i32) {
    %c0_i32 = arith.constant 0 : i32
    %c0_i32_0 = arith.constant 0 : i32
    %c0_i32_1 = arith.constant 0 : i32
    return %c0_i32, %c0_i32_0 : i32, i32
  }
  func.func @transform_2(%arg0: i32) -> (i32, i32) {
    %c0_i32 = arith.constant 0 : i32
    %c0_i32_0 = arith.constant 0 : i32
    %c0_i32_1 = arith.constant 0 : i32
    return %c0_i32, %c0_i32_0 : i32, i32
  }
  func.func @transform_3(%arg0: i32) -> (i32, i32) {
    %c0_i32 = arith.constant 0 : i32
    %c0_i32_0 = arith.constant 0 : i32
    return %arg0, %c0_i32 : i32, i32
  }
}

</mosaic_0001>

<llo_original>
// kernel: tpu_custom_call.1
$region0: #{tpu_custom_call.1}
  #allocation0 [shape = 'u32[]', space=smem, size = 0x4, offset = 0x4, fixed_abs, tag = 'smem constant byte address 0x4 - core index']
  #allocation1 [shape = 'u32[72,128]{1,0:T(1,128)}', space=vmem, size = 0x9000, scoped, tag = 'internal scratch']
  %s0 = inlined_call_operand.vmem [shape: bf16[162,64], index: 0, kind: input, shape index: {}]
  %s1 = inlined_call_operand.vmem [shape: bf16[64,128], index: 1, kind: input, shape index: {}]
  %s2 = inlined_call_operand.vmem [shape: f32[1,128], index: 2, kind: input, shape index: {}]
  %s3 = inlined_call_operand.hbm [shape: f32[162,128], index: 3, kind: output, shape index: {}]
  %s4 = sld [smem:[#allocation0]]
  $region22: #{tpu_custom_call.1} parent=0
    _
  %s6 = ssub.s32 1, %s4
  %s7 = scalar_select 0, %s6, %s4
  $region1: #{tpu_custom_call.1} parent=0
    #allocation2 [shape = 'u8[86016]{0}', space=vmem, size = 0x15000, scoped, tag = 'output window, operand 0, single buffered']
    #allocation3 [shape = 's32[1]{0}', space=sflag, size = 0x4, scoped, tag = 'scoped memory for tpu_custom_call.1']
    %8 = vsyncpa [#allocation3], 0
    // Predicated region
    $region2: #{tpu_custom_call.1} parent=1 // pred_check
      _
    $region3: #{tpu_custom_call.1} parent=1 // pred_check_branch
      %10 = sbr.rel (0) target = $region5
    $region4: #{tpu_custom_call.1} parent=1 // pred_region
      _
    $region5: #{tpu_custom_call.1} parent=1 // pred_fallthru
      _
    // Predicated region
    $region6: #{tpu_custom_call.1} parent=1 // pred_check
      _
    $region7: #{tpu_custom_call.1} parent=1 // pred_check_branch
      %12 = sbr.rel (0) target = $region9
    $region8: #{tpu_custom_call.1} parent=1 // pred_region
      _
    $region9: #{tpu_custom_call.1} parent=1 // pred_fallthru
      _
    // Predicated region
    $region10: #{tpu_custom_call.1} parent=1 // pred_check
      _
    $region11: #{tpu_custom_call.1} parent=1 // pred_check_branch
      %14 = sbr.rel (0) target = $region13
    $region12: #{tpu_custom_call.1} parent=1 // pred_region
      _
    $region13: #{tpu_custom_call.1} parent=1 // pred_fallthru
      _
    %v16 = vld [vmem:[%s0] sm:$0xf]
    %v17 = vld [vmem:[%s0 + $0x4] sm:$0xf]
    %v18 = vld [vmem:[%s0 + $0x8] sm:$0xf]
    %v19 = vld [vmem:[%s0 + $0xc] sm:$0xf]
    %v20 = vld [vmem:[%s0 + $0x10] sm:$0xf]
    %v21 = vld [vmem:[%s0 + $0x14] sm:$0xf]
    %v22 = vld [vmem:[%s0 + $0x18] sm:$0xf]
    %v23 = vld [vmem:[%s0 + $0x1c] sm:$0xf]
    %v24 = vld [vmem:[%s0 + $0x20] sm:$0xf]
    %v25 = vld [vmem:[%s0 + $0x24] sm:$0xf]
    %v26 = vld [vmem:[%s0 + $0x28] sm:$0xf]
    %v27 = vld [vmem:[%s0 + $0x2c] sm:$0xf]
    %v28 = vld [vmem:[%s0 + $0x30] sm:$0xf]
    %v29 = vld [vmem:[%s0 + $0x34] sm:$0xf]
    %v30 = vld [vmem:[%s0 + $0x38] sm:$0xf]
    %v31 = vld [vmem:[%s0 + $0x3c] sm:$0xf]
    %v32 = vld [vmem:[%s0 + $0x40] sm:$0xf]
    %v33 = vld [vmem:[%s0 + $0x44] sm:$0xf]
    %v34 = vld [vmem:[%s0 + $0x48] sm:$0xf]
    %v35 = vld [vmem:[%s0 + $0x4c] sm:$0xf]
    %v36 = vld [vmem:[%s0 + $0x50] sm:$0x1]
    %v37 = vld [vmem:[%s1] sm:$0xf]
    %v38 = vld [vmem:[%s1 + $0x4] sm:$0xf]
    %v39 = vld [vmem:[%s1 + $0x8] sm:$0xf]
    %v40 = vld [vmem:[%s1 + $0xc] sm:$0xf]
    %v41 = vld [vmem:[%s1 + $0x10] sm:$0xf]
    %v42 = vld [vmem:[%s1 + $0x14] sm:$0xf]
    %v43 = vld [vmem:[%s1 + $0x18] sm:$0xf]
    %v44 = vld [vmem:[%s1 + $0x1c] sm:$0xf]
    %v45 = vld [vmem:[%s2] sm:$0x1]
    %v47 = vperm.slane %v45, 0
    %v70 = vunpack.c.l.b16 %v16
    %v71 = vunpack.c.l.b16 %v17
    %v72 = vunpack.c.l.b16 %v18
    %v73 = vunpack.c.l.b16 %v19
    %v74 = vunpack.c.l.b16 %v20
    %v75 = vunpack.c.l.b16 %v21
    %v76 = vunpack.c.l.b16 %v22
    %v77 = vunpack.c.l.b16 %v23
    %v78 = vunpack.c.l.b16 %v24
    %v79 = vunpack.c.l.b16 %v25
    %v80 = vunpack.c.l.b16 %v26
    %v81 = vunpack.c.l.b16 %v27
    %v82 = vunpack.c.l.b16 %v28
    %v83 = vunpack.c.l.b16 %v29
    %v84 = vunpack.c.l.b16 %v30
    %v85 = vunpack.c.l.b16 %v31
    %v86 = vunpack.c.l.b16 %v32
    %v87 = vunpack.c.l.b16 %v33
    %v88 = vunpack.c.l.b16 %v34
    %v89 = vunpack.c.l.b16 %v35
    %v90 = vunpack.c.l.b16 %v36
    %v91 = vpack.c.b16 %v71, %v70
    %v92 = vpack.c.b16 %v73, %v72
    %v93 = vpack.c.b16 %v75, %v74
    %v94 = vpack.c.b16 %v77, %v76
    %v95 = vpack.c.b16 %v79, %v78
    %v96 = vpack.c.b16 %v81, %v80
    %v97 = vpack.c.b16 %v83, %v82
    %v98 = vpack.c.b16 %v85, %v84
    %v99 = vpack.c.b16 %v87, %v86
    %v100 = vpack.c.b16 %v89, %v88
    %v101 = vpack.c.b16 %v90, %v90
    %v110 = vunpack.c.l.b16 %v37
    %v111 = vunpack.c.l.b16 %v38
    %v112 = vunpack.c.l.b16 %v39
    %v113 = vunpack.c.l.b16 %v40
    %v114 = vunpack.c.l.b16 %v41
    %v115 = vunpack.c.l.b16 %v42
    %v116 = vunpack.c.l.b16 %v43
    %v117 = vunpack.c.l.b16 %v44
    %v118 = vpack.c.b16 %v111, %v110
    %v119 = vpack.c.b16 %v113, %v112
    %v120 = vpack.c.b16 %v115, %v114
    %v121 = vpack.c.b16 %v117, %v116
    %vm126 = vcmask 523264
    %v128 = vsel %vm126, %v91, 0
    %v131 = vsel %vm126, %v92, 0
    %v134 = vsel %vm126, %v93, 0
    %v137 = vsel %vm126, %v94, 0
    %v140 = vsel %vm126, %v95, 0
    %v143 = vsel %vm126, %v96, 0
    %v146 = vsel %vm126, %v97, 0
    %v149 = vsel %vm126, %v98, 0
    %v152 = vsel %vm126, %v99, 0
    %v155 = vsel %vm126, %v100, 0
    %v158 = vsel %vm126, %v101, 0
    %160 = vmatpush.bf16.msra.mxu0 0
    %161 = vmatpush.bf16.msra.mxu0 0
    %162 = vmatpush.bf16.msra.mxu0 0
    %163 = vmatpush.bf16.msra.mxu0 0
    %164 = vmatpush.bf16.msra.mxu0 %v121
    %165 = vmatpush.bf16.msra.mxu0 %v120
    %166 = vmatpush.bf16.msra.mxu0 %v119
    %167 = vmatpush.bf16.msra.mxu0 %v118
    %168 = vmatmul.bf16.gmra.mxu0 %v128
    %v169 = vpop.f32.mrf.mxu0
    %v170 = vadd.f32 %v47, %v169
    %v171 = vpop.f32.mrf.mxu0
    %v172 = vadd.f32 %v47, %v171
    %173 = vmatmul.bf16.gmra.mxu0 %v131
    %v174 = vpop.f32.mrf.mxu0
    %v175 = vadd.f32 %v47, %v174
    %v176 = vpop.f32.mrf.mxu0
    %v177 = vadd.f32 %v47, %v176
    %178 = vmatmul.bf16.gmra.mxu0 %v134
    %v179 = vpop.f32.mrf.mxu0
    %v180 = vadd.f32 %v47, %v179
    %v181 = vpop.f32.mrf.mxu0
    %v182 = vadd.f32 %v47, %v181
    %183 = vmatmul.bf16.gmra.mxu0 %v137
    %v184 = vpop.f32.mrf.mxu0
    %v185 = vadd.f32 %v47, %v184
    %v186 = vpop.f32.mrf.mxu0
    %v187 = vadd.f32 %v47, %v186
    %188 = vmatmul.bf16.gmra.mxu0 %v140
    %v189 = vpop.f32.mrf.mxu0
    %v190 = vadd.f32 %v47, %v189
    %v191 = vpop.f32.mrf.mxu0
    %v192 = vadd.f32 %v47, %v191
    %193 = vmatmul.bf16.gmra.mxu0 %v143
    %v194 = vpop.f32.mrf.mxu0
    %v195 = vadd.f32 %v47, %v194
    %v196 = vpop.f32.mrf.mxu0
    %v197 = vadd.f32 %v47, %v196
    %198 = vmatmul.bf16.gmra.mxu0 %v146
    %v199 = vpop.f32.mrf.mxu0
    %v200 = vadd.f32 %v47, %v199
    %v201 = vpop.f32.mrf.mxu0
    %v202 = vadd.f32 %v47, %v201
    %203 = vmatmul.bf16.gmra.mxu0 %v149
    %v204 = vpop.f32.mrf.mxu0
    %v205 = vadd.f32 %v47, %v204
    %v206 = vpop.f32.mrf.mxu0
    %v207 = vadd.f32 %v47, %v206
    %208 = vmatmul.bf16.gmra.mxu0 %v152
    %v209 = vpop.f32.mrf.mxu0
    %v210 = vadd.f32 %v47, %v209
    %v211 = vpop.f32.mrf.mxu0
    %v212 = vadd.f32 %v47, %v211
    %213 = vmatmul.bf16.gmra.mxu0 %v155
    %v214 = vpop.f32.mrf.mxu0
    %v215 = vadd.f32 %v47, %v214
    %v216 = vpop.f32.mrf.mxu0
    %v217 = vadd.f32 %v47, %v216
    %218 = vmatmul.bf16.gmra.mxu0 %v158
    %v219 = vpop.f32.mrf.mxu0
    %v220 = vadd.f32 %v47, %v219
    %v221 = vpop.f32.mrf.mxu0
    %222 = vdwg.mxu0
    %223 = vst [vmem:[#allocation2] sm:$0xff] %v170
    %224 = vst [vmem:[#allocation2 + $0x8] sm:$0xff] %v172
    %225 = vst [vmem:[#allocation2 + $0x10] sm:$0xff] %v175
    %226 = vst [vmem:[#allocation2 + $0x18] sm:$0xff] %v177
    %227 = vst [vmem:[#allocation2 + $0x20] sm:$0xff] %v180
    %228 = vst [vmem:[#allocation2 + $0x28] sm:$0xff] %v182
    %229 = vst [vmem:[#allocation2 + $0x30] sm:$0xff] %v185
    %230 = vst [vmem:[#allocation2 + $0x38] sm:$0xff] %v187
    %231 = vst [vmem:[#allocation2 + $0x40] sm:$0xff] %v190
    %232 = vst [vmem:[#allocation2 + $0x48] sm:$0xff] %v192
    %233 = vst [vmem:[#allocation2 + $0x50] sm:$0xff] %v195
    %234 = vst [vmem:[#allocation2 + $0x58] sm:$0xff] %v197
    %235 = vst [vmem:[#allocation2 + $0x60] sm:$0xff] %v200
    %236 = vst [vmem:[#allocation2 + $0x68] sm:$0xff] %v202
    %237 = vst [vmem:[#allocation2 + $0x70] sm:$0xff] %v205
    %238 = vst [vmem:[#allocation2 + $0x78] sm:$0xff] %v207
    %239 = vst [vmem:[#allocation2 + $0x80] sm:$0xff] %v210
    %240 = vst [vmem:[#allocation2 + $0x88] sm:$0xff] %v212
    %241 = vst [vmem:[#allocation2 + $0x90] sm:$0xff] %v215
    %242 = vst [vmem:[#allocation2 + $0x98] sm:$0xff] %v217
    %243 = vst [vmem:[#allocation2 + $0xa0] sm:$0x3] %v220
    // Predicated region
    $region14: #{tpu_custom_call.1} parent=1 // pred_check
      _
    $region15: #{tpu_custom_call.1} parent=1 // pred_check_branch
      %245 = sbr.rel (0) target = $region17
    $region16: #{tpu_custom_call.1} parent=1 // pred_region
      %247 = vsyncadd [#allocation3], 0
      %s248 = sshll.u32 [#allocation2], 4
      %s249 = int_to_ptr.vmem [resolvable:$true] %s248
      %s250 = sshll.u32 %s3, 4
      %s251 = int_to_ptr.hbm [resolvable:$true] %s250
      %256 = dma.vmem_to_hbm [thread:$0]  %s249, 2688, %s251, [#allocation3], 128, 128, 8
    $region17: #{tpu_custom_call.1} parent=1 // pred_fallthru
      _
    // Predicated region
    $region18: #{tpu_custom_call.1} parent=1 // pred_check
      _
    $region19: #{tpu_custom_call.1} parent=1 // pred_check_branch
      %258 = sbr.rel (0) target = $region21
    $region20: #{tpu_custom_call.1} parent=1 // pred_region
      %260 = dma.done [#allocation3], 2688
    $region21: #{tpu_custom_call.1} parent=1 // pred_fallthru
      _
    %261 = vsyncpa [#allocation3], 1

</llo_original>
